<compile_context>
chip_gen: v6e
topology: v6e:2x2x1
jax: 0.10.0
libtpu: 0.0.40
codegen_flags: <defaults>
</compile_context>

<pallas_src>
import functools

import jax
import jax.numpy as jnp
from jax.experimental import pallas as pl
from jax.experimental.pallas import tpu as pltpu

LANE = 128


def _accuracy_kernel(p_ref, l_ref, out_ref, acc_ref, *, num_classes, s_total,
                     tile_s, total):
    """Accumulate per-lane match counts; emit 1 - matches/total at the end."""
    b = pl.program_id(0)
    si = pl.program_id(1)

    is_first = jnp.logical_and(b == 0, si == 0)

    @pl.when(is_first)
    def _():
        acc_ref[...] = jnp.zeros_like(acc_ref)
        out_ref[0, 0] = jnp.float32(0.0)

    p = p_ref[...].astype(jnp.float32)                       # [C, tile_s]

    # argmax over the class (sublane) axis with first-max tie-breaking,
    # computed as: smallest class index attaining the per-sample max.
    cls = jax.lax.broadcasted_iota(jnp.int32, (num_classes, tile_s), 0)
    cls = cls.astype(jnp.float32)
    row_max = jnp.max(p, axis=0, keepdims=True)              # [1, tile_s]
    first_arg = jnp.min(
        jnp.where(p == row_max, cls, jnp.float32(num_classes)),
        axis=0, keepdims=True)                               # [1, tile_s]

    match = (first_arg == l_ref[...].astype(jnp.float32)).astype(jnp.float32)

    # Mask lanes past the true end of the sample axis (partial last tile).
    lane = jax.lax.broadcasted_iota(jnp.int32, (1, tile_s), 1) + si * tile_s
    match = jnp.where(lane < s_total, match, 0.0)

    acc_ref[...] += match                                    # pure VPU add

    is_last = jnp.logical_and(b == pl.num_programs(0) - 1,
                              si == pl.num_programs(1) - 1)

    @pl.when(is_last)
    def _():
        out_ref[0, 0] = 1.0 - jnp.sum(acc_ref[...]) / jnp.float32(total)


@jax.jit
def accuracy(predictions, labels):
    """JAX/Pallas equivalent of Accuracy.forward (returns 1 - accuracy)."""
    shape = predictions.shape
    assert len(shape) >= 2, "predictions must have a class dim at axis 1"
    B, C = shape[0], shape[1]
    S = 1
    for d in shape[2:]:
        S *= d

    p3 = predictions.reshape(B, C, S)
    l3 = labels.reshape(B, 1, S).astype(jnp.int32)

    # Lane-tile along the sample axis: ~2 MiB predictions block, multiple of
    # 128 lanes, or the full axis when it already fits (no jnp.pad needed).
    target_block_bytes = 2 * 1024 * 1024
    max_tile_s = max(LANE, (target_block_bytes // (4 * C)) // LANE * LANE)
    tile_s = S if S <= max_tile_s else max_tile_s
    n_s = pl.cdiv(S, tile_s)
    total = B * S

    kernel = functools.partial(
        _accuracy_kernel,
        num_classes=C, s_total=S, tile_s=tile_s, total=total)

    out = pl.pallas_call(
        kernel,
        out_shape=jax.ShapeDtypeStruct((1, 1), jnp.float32),
        grid_spec=pltpu.PrefetchScalarGridSpec(
            num_scalar_prefetch=0,
            grid=(B, n_s),
            in_specs=[
                pl.BlockSpec((None, C, tile_s), lambda b, s: (b, 0, s)),
                pl.BlockSpec((None, 1, tile_s), lambda b, s: (b, 0, s)),
            ],
            out_specs=pl.BlockSpec((1, 1), lambda b, s: (0, 0),
                                   memory_space=pltpu.SMEM),
            scratch_shapes=[pltpu.VMEM((1, tile_s), jnp.float32)],
        ),
        compiler_params=pltpu.CompilerParams(
            # single running reduction -> both grid axes are reduction axes
            dimension_semantics=("arbitrary", "arbitrary"),
        ),
    )(p3, l3)
    return out[0, 0]


if __name__ == "__main__":
    key = jax.random.PRNGKey(0)
    k1, k2 = jax.random.split(key)

    # NCHW per-pixel logits over 4 classes, and integer class labels.
    predictions = jax.random.normal(k1, (2, 4, 16, 16), dtype=jnp.float32)
    labels = jax.random.randint(k2, (2, 16, 16), 0, 4, dtype=jnp.int32)

    err = accuracy(predictions, labels)
    err = jax.block_until_ready(err)

    # Pure-JAX reference of Accuracy.forward (jnp.argmax = first-max, same as torch).
    vals = jnp.argmax(predictions, axis=1)
    expected = 1.0 - jnp.mean(
        (vals.reshape(-1, 1) == labels.reshape(-1, 1)).astype(predictions.dtype))

    assert jnp.allclose(err, expected, rtol=1e-6, atol=1e-6), (err, expected)
    print("KERNEL_OK")
</pallas_src>

<mosaic_0001>
module attributes {stable_mosaic.version = 11 : i64} {
  func.func @_accuracy_kernel(%arg0: i32, %arg1: i32, %arg2: memref<1x4x256xf32, #tpu.memory_space<vmem>>, %arg3: memref<1x1x256xi32, #tpu.memory_space<vmem>>, %arg4: memref<1x1xf32, #tpu.memory_space<smem>>, %arg5: memref<1x256xf32, #tpu.memory_space<vmem>>) attributes {dimension_semantics = [#tpu.dimension_semantics<arbitrary>, #tpu.dimension_semantics<arbitrary>], iteration_bounds = array<i64: 2, 1>, scalar_prefetch = 0 : i64, scratch_operands = 1 : i64, tpu.core_type = #tpu.core_type<tc>, window_params = [{transform_indices = @transform_0, window_bounds = array<i64: 1, 4, 256>}, {transform_indices = @transform_1, window_bounds = array<i64: 1, 1, 256>}, {transform_indices = @transform_2, window_bounds = array<i64: 1, 1>}]} {
    %c0_i32 = arith.constant 0 : i32
    %0 = arith.cmpi eq, %arg0, %c0_i32 : i32
    %c0_i32_0 = arith.constant 0 : i32
    %1 = arith.cmpi eq, %arg1, %c0_i32_0 : i32
    %2 = arith.andi %0, %1 : i1
    %3 = arith.extui %2 : i1 to i32
    %c0_i32_1 = arith.constant 0 : i32
    %4 = arith.cmpi ne, %3, %c0_i32_1 : i32
    scf.if %4 {
      %cst_17 = arith.constant 0.000000e+00 : f32
      %39 = vector.broadcast %cst_17 : f32 to vector<1x256xf32>
      %c0_18 = arith.constant 0 : index
      %c0_19 = arith.constant 0 : index
      %40 = vector.load %arg5[%c0_18, %c0_19] : memref<1x256xf32, #tpu.memory_space<vmem>>, vector<1x256xf32>
      tpu.vector_store %arg5[%c0_18, %c0_19], %39 {strides = array<i32>} : memref<1x256xf32, #tpu.memory_space<vmem>>, vector<1x256xf32>,
      %cst_20 = arith.constant 0.000000e+00 : f32
      %c0_21 = arith.constant 0 : index
      %c0_22 = arith.constant 0 : index
      %41 = memref.load %arg4[%c0_21, %c0_22] : memref<1x1xf32, #tpu.memory_space<smem>>
      memref.store %cst_20, %arg4[%c0_21, %c0_22] : memref<1x1xf32, #tpu.memory_space<smem>>
    } else {
    }
    %c0 = arith.constant 0 : index
    %c0_2 = arith.constant 0 : index
    %c0_3 = arith.constant 0 : index
    %5 = vector.load %arg2[%c0, %c0_2, %c0_3] : memref<1x4x256xf32, #tpu.memory_space<vmem>>, vector<1x4x256xf32>
    %6 = vector.shape_cast %5 : vector<1x4x256xf32> to vector<4x256xf32>
    %7 = tpu.iota {dimensions = array<i32: 0>} : vector<4x256xi32>
    %8 = arith.sitofp %7 : vector<4x256xi32> to vector<4x256xf32>
    %cst = arith.constant dense<0xFF800000> : vector<256xf32>
    %9 = vector.multi_reduction <maximumf>, %6, %cst [0] : vector<4x256xf32> to vector<256xf32>
    %10 = vector.shape_cast %9 : vector<256xf32> to vector<1x256xf32>
    %11 = vector.broadcast %10 : vector<1x256xf32> to vector<4x256xf32>
    %12 = arith.cmpf oeq, %6, %11 : vector<4x256xf32>
    %cst_4 = arith.constant 4.000000e+00 : f32
    %13 = vector.broadcast %cst_4 : f32 to vector<4x256xf32>
    %14 = arith.select %12, %8, %13 : vector<4x256xi1>, vector<4x256xf32>
    %cst_5 = arith.constant dense<0x7F800000> : vector<256xf32>
    %15 = vector.multi_reduction <minimumf>, %14, %cst_5 [0] : vector<4x256xf32> to vector<256xf32>
    %16 = vector.shape_cast %15 : vector<256xf32> to vector<1x256xf32>
    %c0_6 = arith.constant 0 : index
    %c0_7 = arith.constant 0 : index
    %c0_8 = arith.constant 0 : index
    %17 = vector.load %arg3[%c0_6, %c0_7, %c0_8] : memref<1x1x256xi32, #tpu.memory_space<vmem>>, vector<1x1x256xi32>
    %18 = vector.shape_cast %17 : vector<1x1x256xi32> to vector<1x256xi32>
    %19 = arith.sitofp %18 : vector<1x256xi32> to vector<1x256xf32>
    %20 = arith.cmpf oeq, %16, %19 : vector<1x256xf32>
    %21 = arith.extui %20 : vector<1x256xi1> to vector<1x256xi32>
    %22 = arith.sitofp %21 : vector<1x256xi32> to vector<1x256xf32>
    %23 = tpu.iota {dimensions = array<i32: 1>} : vector<1x256xi32>
    %c256_i32 = arith.constant 256 : i32
    %24 = arith.muli %arg1, %c256_i32 : i32
    %25 = vector.broadcast %24 : i32 to vector<1x256xi32>
    %26 = arith.addi %23, %25 : vector<1x256xi32>
    %c256_i32_9 = arith.constant 256 : i32
    %27 = vector.broadcast %c256_i32_9 : i32 to vector<1x256xi32>
    %28 = arith.cmpi slt, %26, %27 : vector<1x256xi32>
    %cst_10 = arith.constant 0.000000e+00 : f32
    %29 = vector.broadcast %cst_10 : f32 to vector<1x256xf32>
    %30 = arith.select %28, %22, %29 : vector<1x256xi1>, vector<1x256xf32>
    %c0_11 = arith.constant 0 : index
    %c0_12 = arith.constant 0 : index
    %31 = vector.load %arg5[%c0_11, %c0_12] : memref<1x256xf32, #tpu.memory_space<vmem>>, vector<1x256xf32>
    %32 = arith.addf %31, %30 : vector<1x256xf32>
    %c0_13 = arith.constant 0 : index
    %c0_14 = arith.constant 0 : index
    %33 = vector.load %arg5[%c0_13, %c0_14] : memref<1x256xf32, #tpu.memory_space<vmem>>, vector<1x256xf32>
    tpu.vector_store %arg5[%c0_13, %c0_14], %32 {strides = array<i32>} : memref<1x256xf32, #tpu.memory_space<vmem>>, vector<1x256xf32>,
    %c1_i32 = arith.constant 1 : i32
    %34 = arith.cmpi eq, %arg0, %c1_i32 : i32
    %c0_i32_15 = arith.constant 0 : i32
    %35 = arith.cmpi eq, %arg1, %c0_i32_15 : i32
    %36 = arith.andi %34, %35 : i1
    %37 = arith.extui %36 : i1 to i32
    %c0_i32_16 = arith.constant 0 : i32
    %38 = arith.cmpi ne, %37, %c0_i32_16 : i32
    scf.if %38 {
      %c0_17 = arith.constant 0 : index
      %c0_18 = arith.constant 0 : index
      %39 = vector.load %arg5[%c0_17, %c0_18] : memref<1x256xf32, #tpu.memory_space<vmem>>, vector<1x256xf32>
      %40 = vector.shape_cast %39 : vector<1x256xf32> to vector<1x1x256xf32>
      %cst_19 = arith.constant dense<0.000000e+00> : vector<1xf32>
      %41 = vector.multi_reduction <add>, %40, %cst_19 [1, 2] : vector<1x1x256xf32> to vector<1xf32>
      %42 = vector.shape_cast %41 : vector<1xf32> to vector<1x1x1xf32>
      %43 = vector.extract %42[0, 0, 0] : f32 from vector<1x1x1xf32>
      %cst_20 = arith.constant 5.120000e+02 : f32
      %44 = arith.divf %43, %cst_20 : f32
      %cst_21 = arith.constant 1.000000e+00 : f32
      %45 = arith.subf %cst_21, %44 : f32
      %c0_22 = arith.constant 0 : index
      %c0_23 = arith.constant 0 : index
      %46 = memref.load %arg4[%c0_22, %c0_23] : memref<1x1xf32, #tpu.memory_space<smem>>
      memref.store %45, %arg4[%c0_22, %c0_23] : memref<1x1xf32, #tpu.memory_space<smem>>
    } else {
    }
    return
  }
  func.func @transform_0(%arg0: i32, %arg1: i32) -> (i32, i32, i32) {
    %c0_i32 = arith.constant 0 : i32
    %c0_i32_0 = arith.constant 0 : i32
    return %arg0, %c0_i32, %arg1 : i32, i32, i32
  }
  func.func @transform_1(%arg0: i32, %arg1: i32) -> (i32, i32, i32) {
    %c0_i32 = arith.constant 0 : i32
    %c0_i32_0 = arith.constant 0 : i32
    return %arg0, %c0_i32, %arg1 : i32, i32, i32
  }
  func.func @transform_2(%arg0: i32, %arg1: i32) -> (i32, i32) {
    %c0_i32 = arith.constant 0 : i32
    %c0_i32_0 = arith.constant 0 : i32
    %c0_i32_1 = arith.constant 0 : i32
    return %c0_i32, %c0_i32_0 : i32, i32
  }
}

</mosaic_0001>

<llo_original>
// kernel: accuracy.1
$region0: #{accuracy.1}
  #allocation0 [shape = 'u32[]', space=smem, size = 0x4, offset = 0x4, fixed_abs, tag = 'smem constant byte address 0x4 - core index']
  #allocation1 [shape = 'u32[144,128]{1,0:T(1,128)}', space=vmem, size = 0x12000, scoped, tag = 'internal scratch']
  #allocation2 [shape = 'f32[1,256]{1,0:T(1,128)}', space=vmem, size = 0x400, scoped, tag = 'scratch operand']
  %s0 = inlined_call_operand.vmem [shape: f32[2,4,256], index: 0, kind: input, shape index: {}]
  %s1 = inlined_call_operand.vmem [shape: s32[2,1,256], index: 1, kind: input, shape index: {}]
  %s2 = inlined_call_operand.hbm [shape: f32[1,1], index: 2, kind: output, shape index: {}]
  %s3 = sld [smem:[#allocation0]]
  $region49: #{accuracy.1} parent=0
    _
  %s5 = ssub.s32 1, %s3
  %s6 = scalar_select 0, %s5, %s3
  $region1: #{accuracy.1} parent=0
    #allocation3 [shape = 'u8[512]{0}', space=smem, size = 0x200, scoped, tag = 'output window, operand 0, single buffered']
    #allocation4 [shape = 's32[2]{0}', space=sflag, size = 0x8, scoped, tag = 'scoped memory for accuracy.1']
    %7 = vsyncpa [#allocation4], 0
    loop: start=0, step=1, limit=4
    $region2: #{accuracy.1} parent=1 // loop_pre_header
      _
    $region3: #{accuracy.1} parent=1 // loop_header
      %s9 = sphi 0, %s13
      %p10 = scmp.ge.s32.totalorder %s9, 4
      %s16 = sphi 0, %s28
      %s17 = sphi 0, %s24
      %s18 = sphi 0, %s16
      %s19 = sphi 0, %s17
      %s20 = sphi 0, %s18
      %s21 = sphi 0, %s19
      %s33 = sphi 0, %s35
      %s36 = sphi 0, %s33
      %s37 = sphi 0, %s36
      %s53 = sphi 0, %s37
      %s61 = sphi 0, %s63
      %s64 = sphi 0, %s61
      %s65 = sphi 0, %s64
      %s81 = sphi 0, %s65
      %s85 = sphi 0, %s85
      %s87 = sphi 0, %s85
      %s88 = sphi 0, %s87
      %s102 = sphi 0, %s88
    $region4: #{accuracy.1} parent=1 // loop_header_branch
      %12 = sbr.rel (%p10) target = $region8
    $region5: #{accuracy.1} parent=1 // loop_body
      %s14 = ssub.s32 %s9, 1
      %s15 = ssub.s32 %s9, 2
      %s22 = sadd.s32 1, %s17
      %p23 = scmp.ge.s32.totalorder %s22, 1
      %s24 = scalar_select %p23, 0, %s22
      %s25 = sadd.s32 1, %s16
      %s26 = scalar_select %p23, %s25, %s16
      %p27 = scmp.ge.s32.totalorder %s26, 2
      %s28 = scalar_select %p27, 0, %s26
      %s29 = ssub.s32 %s16, %s28
      %s30 = ssub.s32 %s17, %s24
      %s31 = sor.u32 %s29, %s30
      %p32 = scmp.eq.s32.totalorder %s31, 0
      %s34 = sadd.s32 %s33, 1
      %s35 = scalar_select %p32, %s33, %s34
      %p38 = pneg %p32
      %p39 = scmp.eq.s32.totalorder %s9, 1
      %p40 = por %p38, %p39
      %p41 = scmp.ne.s32.totalorder %s33, %s36
      %p42 = scmp.eq.s32.totalorder %s9, 0
      %p43 = por %p41, %p42
      %p44 = scmp.ne.s32.totalorder %s33, %s36
      %p45 = scmp.eq.s32.totalorder %s14, 1
      %p46 = por %p44, %p45
      %p47 = scmp.ne.s32.totalorder %s36, %s37
      %p48 = scmp.eq.s32.totalorder %s14, 0
      %p49 = por %p47, %p48
      %p50 = scmp.ne.s32.totalorder %s36, %s37
      %p51 = scmp.eq.s32.totalorder %s15, 1
      %p52 = por %p50, %p51
      %p54 = scmp.ne.s32.totalorder %s37, %s53
      %p55 = scmp.eq.s32.totalorder %s15, 0
      %p56 = por %p54, %p55
      %s57 = ssub.s32 %s16, %s28
      %s58 = ssub.s32 %s17, %s24
      %s59 = sor.u32 %s57, %s58
      %p60 = scmp.eq.s32.totalorder %s59, 0
      %s62 = sadd.s32 %s61, 1
      %s63 = scalar_select %p60, %s61, %s62
      %p66 = pneg %p60
      %p67 = scmp.eq.s32.totalorder %s9, 1
      %p68 = por %p66, %p67
      %p69 = scmp.ne.s32.totalorder %s61, %s64
      %p70 = scmp.eq.s32.totalorder %s9, 0
      %p71 = por %p69, %p70
      %p72 = scmp.ne.s32.totalorder %s61, %s64
      %p73 = scmp.eq.s32.totalorder %s14, 1
      %p74 = por %p72, %p73
      %p75 = scmp.ne.s32.totalorder %s64, %s65
      %p76 = scmp.eq.s32.totalorder %s14, 0
      %p77 = por %p75, %p76
      %p78 = scmp.ne.s32.totalorder %s64, %s65
      %p79 = scmp.eq.s32.totalorder %s15, 1
      %p80 = por %p78, %p79
      %p82 = scmp.ne.s32.totalorder %s65, %s81
      %p83 = scmp.eq.s32.totalorder %s15, 0
      %p84 = por %p82, %p83
      %s86 = sadd.s32 %s85, 1
      %p89 = scmp.eq.s32.totalorder %s9, 1
      %p90 = scmp.ne.s32.totalorder %s85, %s87
      %p91 = scmp.eq.s32.totalorder %s9, 0
      %p92 = por %p90, %p91
      %p93 = scmp.ne.s32.totalorder %s85, %s87
      %p94 = scmp.eq.s32.totalorder %s14, 1
      %p95 = por %p93, %p94
      %p96 = scmp.ne.s32.totalorder %s87, %s88
      %p97 = scmp.eq.s32.totalorder %s14, 0
      %p98 = por %p96, %p97
      %p99 = scmp.ne.s32.totalorder %s87, %s88
      %p100 = scmp.eq.s32.totalorder %s15, 1
      %p101 = por %p99, %p100
      %p103 = scmp.ne.s32.totalorder %s88, %s102
      %p104 = scmp.eq.s32.totalorder %s15, 0
      %p105 = por %p103, %p104
      %p106 = scmp.le.s32.totalorder 1, %s9
      %p107 = scmp.lt.s32.totalorder %s9, 3
      %p108 = pnand %p106, %p107
      %p109 = pneg %p108
      // Predicated region
      $region9: #{accuracy.1} parent=5 // pred_check
        _
      $region10: #{accuracy.1} parent=5 // pred_check_branch
        %111 = sbr.rel (%p108) target = $region12
      $region11: #{accuracy.1} parent=5 // pred_region
        %s112 = ssub.s32 %s9, 1
      $region12: #{accuracy.1} parent=5 // pred_fallthru
        _
      %p113 = scmp.lt.s32.totalorder %s9, 2
      // Predicated region
      $region13: #{accuracy.1} parent=5 // pred_check
        %p114 = pneg %p113
      $region14: #{accuracy.1} parent=5 // pred_check_branch
        %116 = sbr.rel (%p114) target = $region16
      $region15: #{accuracy.1} parent=5 // pred_region
        // Predicated region
        $region17: #{accuracy.1} parent=15 // pred_check
          %p117 = pneg %p43
        $region18: #{accuracy.1} parent=15 // pred_check_branch
          %119 = sbr.rel (%p117) target = $region20
        $region19: #{accuracy.1} parent=15 // pred_region
          %s120 = smul.u32 2, %s17
          %p121 = scmp.lt.s32.totalorder %s16, 1
          %s122 = scalar_select %p121, %s16, 1
          %p123 = scmp.lt.s32.totalorder %s120, 1
          %s124 = scalar_select %p123, %s120, 1
          %s125 = smul.addr %s122, 2
          %s126 = sadd.s32 %s124, %s125
          %s127 = smul.addr %s126, 4
          %s128 = scalar_lea.vmem %s0, %s127
          %s129 = smul.u32 2, %s17
        $region20: #{accuracy.1} parent=15 // pred_fallthru
          _
        // Predicated region
        $region21: #{accuracy.1} parent=15 // pred_check
          %p130 = pneg %p71
        $region22: #{accuracy.1} parent=15 // pred_check_branch
          %132 = sbr.rel (%p130) target = $region24
        $region23: #{accuracy.1} parent=15 // pred_region
          %s133 = smul.u32 2, %s17
          %p134 = scmp.lt.s32.totalorder %s16, 1
          %s135 = scalar_select %p134, %s16, 1
          %p136 = scmp.lt.s32.totalorder %s133, 1
          %s137 = scalar_select %p136, %s133, 1
          %s138 = smul.addr %s135, 2
          %s139 = sadd.s32 %s137, %s138
          %s140 = scalar_lea.vmem %s1, %s139
          %s141 = smul.u32 2, %s17
        $region24: #{accuracy.1} parent=15 // pred_fallthru
          _
      $region16: #{accuracy.1} parent=5 // pred_fallthru
        _
      %p142 = scmp.le.s32.totalorder 1, %s9
      %p143 = scmp.lt.s32.totalorder %s9, 3
      %p144 = pnand %p142, %p143
      %p145 = pneg %p144
      // Predicated region
      $region25: #{accuracy.1} parent=5 // pred_check
        _
      $region26: #{accuracy.1} parent=5 // pred_check_branch
        %147 = sbr.rel (%p144) target = $region28
      $region27: #{accuracy.1} parent=5 // pred_region
        %s148 = ssub.s32 %s9, 1
        %s149 = smul.u32 2, %s19
        %p150 = scmp.lt.s32.totalorder %s18, 1
        %s151 = scalar_select %p150, %s18, 1
        %p152 = scmp.lt.s32.totalorder %s149, 1
        %s153 = scalar_select %p152, %s149, 1
        %s154 = smul.addr %s151, 2
        %s155 = sadd.s32 %s153, %s154
        %s156 = smul.addr %s155, 4
        %s157 = scalar_lea.vmem %s0, %s156
        %p158 = pneg %p49
        %p159 = pneg %p46
        %s160 = smul.u32 2, %s19
        %p161 = scmp.lt.s32.totalorder %s18, 1
        %s162 = scalar_select %p161, %s18, 1
        %p163 = scmp.lt.s32.totalorder %s160, 1
        %s164 = scalar_select %p163, %s160, 1
        %s165 = smul.addr %s162, 2
        %s166 = sadd.s32 %s164, %s165
        %s167 = scalar_lea.vmem %s1, %s166
        %p168 = pneg %p77
        %p169 = pneg %p74
        %p170 = pneg %p98
        %p171 = pneg %p95
        %s172 = smul.u32 2, %s19
        %p173 = scmp.lt.s32.totalorder %s18, 1
        %s174 = scalar_select %p173, %s18, 1
        %p175 = scmp.lt.s32.totalorder %s172, 1
        %s176 = scalar_select %p175, %s172, 1
        %s177 = smul.addr %s174, 2
        %s178 = sadd.s32 %s176, %s177
        %s179 = smul.addr %s178, 4
        %s180 = scalar_lea.vmem %s0, %s179
        %s181 = smul.u32 2, %s19
        %s182 = smul.u32 2, %s19
        %p183 = scmp.lt.s32.totalorder %s18, 1
        %s184 = scalar_select %p183, %s18, 1
        %p185 = scmp.lt.s32.totalorder %s182, 1
        %s186 = scalar_select %p185, %s182, 1
        %s187 = smul.addr %s184, 2
        %s188 = sadd.s32 %s186, %s187
        %s189 = scalar_lea.vmem %s1, %s188
        %s190 = smul.u32 2, %s19
        %p191 = scmp.eq.s32.totalorder %s18, 0
        %p192 = scmp.eq.s32.totalorder %s19, 0
        %p193 = pnand %p191, %p192
        %p194 = pneg %p193
        // Predicated region
        $region29: #{accuracy.1} parent=27 // pred_check
          _
        $region30: #{accuracy.1} parent=27 // pred_check_branch
          %196 = sbr.rel (%p193) target = $region32
        $region31: #{accuracy.1} parent=27 // pred_region
          %v197 = vlaneseq
          %vm198 = vcmp.ge.s32.totalorder %v197, 0
          %vm199 = vcmp.lt.s32.totalorder %v197, 256
          %vm200 = vmand %vm198, %vm199
          %201 = vst.msk [vmem:[#allocation2] sm:$0x3] %vm200, 0.0
          %s202 = scalar_lea.smem [#allocation3], 0
          %203 = sst [smem:[%s202]] 0.0
        $region32: #{accuracy.1} parent=27 // pred_fallthru
          _
        %v204 = vld [vmem:[%s180] sm:$0xff]
        %v205 = vlaneseq
        %v206 = vshrl.u32 %v205, 7
        %v207 = vcvt.s32.f32 %v206
        %v209 = vcombine.high %v204, %v204
        %vm211 = vcmask 1043456
        %v212 = vsel %vm211, %v204, -inf
        %v213 = vrot.slane %v212, 4
        %v214 = vmax.f32 %v212, %v213
        %v215 = vrot.slane %v214, 2
        %v216 = vmax.f32 %v214, %v215
        %v217 = vrot.slane %v216, 1
        %v218 = vmax.f32 %v216, %v217
        %v219 = vsel %vm211, %v209, -inf
        %v220 = vrot.slane %v219, 4
        %v221 = vmax.f32 %v219, %v220
        %v222 = vrot.slane %v221, 2
        %v223 = vmax.f32 %v221, %v222
        %v224 = vrot.slane %v223, 1
        %v225 = vmax.f32 %v223, %v224
        %v228 = vcombine.low %v218, %v225
        %vm230 = vcmp.eq.f32.partialorder %v204, %v228
        %v233 = vunpack.c.l.s4 839922192
        %v234 = vunpack.c.0.s8 %v233
        %v235 = vlaneseq
        %v236 = vshrl.u32 %v235, 7
        %v237 = vsub.s32 %v234, %v236
        %v238 = vrot.slane %v207, %v237
        %v240 = vsel %vm230, %v238, 4.0
        %v242 = vcombine.high %v240, %v240
        %v244 = vsel %vm211, %v240, inf
        %v245 = vrot.slane %v244, 4
        %v246 = vmin.f32 %v244, %v245
        %v247 = vrot.slane %v246, 2
        %v248 = vmin.f32 %v246, %v247
        %v249 = vrot.slane %v248, 1
        %v250 = vmin.f32 %v248, %v249
        %v251 = vsel %vm211, %v242, inf
        %v252 = vrot.slane %v251, 4
        %v253 = vmin.f32 %v251, %v252
        %v254 = vrot.slane %v253, 2
        %v255 = vmin.f32 %v253, %v254
        %v256 = vrot.slane %v255, 1
        %v257 = vmin.f32 %v255, %v256
        %v258 = vld [vmem:[%s189] sm:$0x3]
        %v259 = vcvt.s32.f32 %v258
        %v261 = vlaneseq
        %v262 = vshrl.u32 %v261, 7
        %v263 = vsub.s32 0, %v262
        %v264 = vrot.slane %v259, %v263
        %v265 = vlaneseq
        %v266 = vshrl.u32 %v265, 7
        %v267 = vsub.s32 1, %v266
        %v268 = vrot.slane %v259, %v267
        %vm271 = vcmp.eq.f32.partialorder %v250, %v264
        %vm272 = vcmp.eq.f32.partialorder %v257, %v268
        %v273 = vsel %vm271, 1, 0
        %v274 = vsel %vm272, 1, 0
        %v275 = vcvt.s32.f32 %v273
        %v276 = vcvt.s32.f32 %v274
        %v277 = vlaneseq
        %v278 = vand.u32 %v277, 127
        %v279 = vadd.s32 %v278, 128
        %s280 = smul.u32 %s19, 256
        %v281 = vstv %s280
        %v282 = vadd.s32 %v278, %v281
        %v283 = vadd.s32 %v279, %v281
        %vm284 = vcmp.lt.s32.totalorder %v282, 256
        %vm285 = vcmp.lt.s32.totalorder %v283, 256
        %v286 = vsel %vm284, %v275, 0.0
        %v287 = vsel %vm285, %v276, 0.0
        %v288 = vld [vmem:[#allocation2] sm:$0x3]
        %v291 = vcombine.low %v286, %v287
        %v293 = vunpack.c.l.s4 1966171168
        %v294 = vunpack.c.0.s8 %v293
        %v295 = vlaneseq
        %v296 = vshrl.u32 %v295, 7
        %v297 = vsub.s32 %v294, %v296
        %v298 = vrot.slane %v291, %v297
        %v300 = vunpack.c.l.s4 1966171168
        %v301 = vunpack.c.0.s8 %v300
        %v302 = vlaneseq
        %v303 = vshrl.u32 %v302, 7
        %v304 = vsub.s32 %v301, %v303
        %v305 = vrot.slane %v298, %v304
        %v307 = vadd.f32 %v288, %v305
        %v308 = vlaneseq
        %vm309 = vcmp.ge.s32.totalorder %v308, 0
        %vm310 = vcmp.lt.s32.totalorder %v308, 256
        %vm311 = vmand %vm309, %vm310
        %312 = vst.msk [vmem:[#allocation2] sm:$0x3] %vm311, %v307
        %p313 = scmp.eq.s32.totalorder %s18, 1
        %p314 = pnand %p313, %p192
        %p315 = pneg %p314
        // Predicated region
        $region33: #{accuracy.1} parent=27 // pred_check
          _
        $region34: #{accuracy.1} parent=27 // pred_check_branch
          %317 = sbr.rel (%p314) target = $region36
        $region35: #{accuracy.1} parent=27 // pred_region
          %v318 = vld [vmem:[#allocation2] sm:$0x3]
          %v320 = vlaneseq
          %v321 = vshrl.u32 %v320, 7
          %v322 = vsub.s32 0, %v321
          %v323 = vrot.slane %v318, %v322
          %v324 = vlaneseq
          %v325 = vshrl.u32 %v324, 7
          %v326 = vsub.s32 1, %v325
          %v327 = vrot.slane %v318, %v326
          %vm330 = vcmask 1040384
          %v331 = vsel %vm330, %v323, 0.0
          %v332 = vsel %vm330, %v327, 0.0
          %v333 = vadd.f32 %v331, %v332
          %334 = vadd.xlane.f32.xlu0 %v333
          %v335 = vpop.xlane.xlu0 %334
          %v336 = vrot.slane %v335, 4
          %v337 = vadd.f32 %v335, %v336
          %v338 = vrot.slane %v337, 2
          %v339 = vadd.f32 %v337, %v338
          %v340 = vrot.slane %v339, 1
          %v341 = vadd.f32 %v339, %v340
          %s342 = vtos %v341
          %v343 = vrcp.pop 512.0
          %s344 = vtos %v343
          %s345 = smul.f32 %s342, %s344
          %s346 = ssub.f32 1.0, %s345
          %s347 = scalar_lea.smem [#allocation3], 0
          %348 = sst [smem:[%s347]] %s346
        $region36: #{accuracy.1} parent=27 // pred_fallthru
          _
        // Predicated region
        $region37: #{accuracy.1} parent=27 // pred_check
          %p349 = pneg %p95
        $region38: #{accuracy.1} parent=27 // pred_check_branch
          %351 = sbr.rel (%p349) target = $region40
        $region39: #{accuracy.1} parent=27 // pred_region
          %s353 = ssub.s32 16, 16
          %354 = vsyncadd [#allocation4], %s353
          %357 = dma.smem_to_hbm [#allocation3], 16, %s2, [#allocation4]
        $region40: #{accuracy.1} parent=27 // pred_fallthru
          _
        // Predicated region
        $region41: #{accuracy.1} parent=27 // pred_check
          %p358 = pneg %p95
        $region42: #{accuracy.1} parent=27 // pred_check_branch
          %360 = sbr.rel (%p358) target = $region44
        $region43: #{accuracy.1} parent=27 // pred_region
          %361 = dma.done [#allocation4], 16
        $region44: #{accuracy.1} parent=27 // pred_fallthru
          _
        %362 = sfence
      $region28: #{accuracy.1} parent=5 // pred_fallthru
        _
      %p363 = scmp.le.s32.totalorder 2, %s9
      // Predicated region
      $region45: #{accuracy.1} parent=5 // pred_check
        %p364 = pneg %p363
      $region46: #{accuracy.1} parent=5 // pred_check_branch
        %366 = sbr.rel (%p364) target = $region48
      $region47: #{accuracy.1} parent=5 // pred_region
        %s367 = ssub.s32 %s9, 2
      $region48: #{accuracy.1} parent=5 // pred_fallthru
        _
    $region6: #{accuracy.1} parent=1 // loop_footer
      %s13 = sadd.s32 1, %s9
    $region7: #{accuracy.1} parent=1 // loop_footer_branch
      %8 = sbr.rel target = $region3
    $region8: #{accuracy.1} parent=1 // loop_exit
      _
    %368 = vsyncpa [#allocation4], 1
    %s369 = scalar_lea.sflag [#allocation4], 1
    %370 = vsyncpa %s369, 1

</llo_original>
